<compile_context>
chip_gen: v7x
topology: tpu7x:2x2x1
jax: 0.10.0
libtpu: 0.0.40
codegen_flags: <defaults>
</compile_context>

<pallas_src>
import functools

import jax
import jax.numpy as jnp
from jax.experimental import pallas as pl
from jax.experimental.pallas import tpu as pltpu

HEAD_WIDTH = 128  # packed output slab width (one full lane group)


def _round_up(x, m):
    return ((x + m - 1) // m) * m


def _layernorm(x, gamma, beta, eps=1e-5):
    mu = jnp.mean(x, axis=-1, keepdims=True)
    var = jnp.mean((x - mu) * (x - mu), axis=-1, keepdims=True)
    return (x - mu) * jax.lax.rsqrt(var + eps) * gamma + beta


def _dot_bf16(x_f32, w_bf16):
    # bf16 x bf16 -> f32 accumulation on the MXU.
    return jnp.dot(x_f32.astype(jnp.bfloat16), w_bf16,
                   preferred_element_type=jnp.float32)


def _actor_critic_kernel(
    # inputs
    state_ref,
    w1_ref, b1_ref, g1_ref, be1_ref,
    w2_ref, b2_ref, g2_ref, be2_ref,
    wac_ref, bac_ref, ga_ref, bea_ref, gc_ref, bec_ref,
    wh2_ref, bh2_ref,
    # output: packed (TB, 128) slab
    out_ref,
    *, max_action, action_dim,
):
    s = state_ref[...]

    # ---- feature trunk (f32 LayerNorm / ReLU, bf16 matmul inputs) ----
    x = _dot_bf16(s, w1_ref[...]) + b1_ref[...]
    x = jnp.maximum(_layernorm(x, g1_ref[...], be1_ref[...]), 0.0)
    x = _dot_bf16(x, w2_ref[...]) + b2_ref[...]
    x = jnp.maximum(_layernorm(x, g2_ref[...], be2_ref[...]), 0.0)

    # ---- fused actor|critic branch: one (TB,256)x(256,256) MXU pass ----
    # (x is cast to bf16 exactly once inside _dot_bf16)
    acx = _dot_bf16(x, wac_ref[...]) + bac_ref[...]          # (TB, 256)
    a_half = jnp.maximum(_layernorm(acx[:, :128], ga_ref[...], bea_ref[...]), 0.0)
    c_half = jnp.maximum(_layernorm(acx[:, 128:], gc_ref[...], bec_ref[...]), 0.0)
    axcx = jnp.concatenate([a_half, c_half], axis=-1)        # (TB, 256), lane-aligned

    # ---- fused head: mean | log_std | value lanes in one (256,128) MXU pass ----
    head = _dot_bf16(axcx, wh2_ref[...]) + bh2_ref[...]      # (TB, 128)

    lane = jax.lax.broadcasted_iota(jnp.int32, head.shape, 1)
    mean_lanes = lane < action_dim
    std_lanes = (lane >= action_dim) & (lane < 2 * action_dim)
    value_lane = lane == 2 * action_dim

    # Single full-width exp: tanh(h) = (exp(2h)-1)/(exp(2h)+1); std lanes reuse
    # the same exp on their clipped log_std.  Halves EUP pressure vs tanh+exp.
    z = jnp.where(mean_lanes,
                  jnp.clip(2.0 * head, -60.0, 60.0),
                  jnp.clip(head, -20.0, 2.0))
    e = jnp.exp(z)
    tanh_h = (e - 1.0) * pl.reciprocal(e + 1.0, approx=True)

    out_ref[...] = jnp.where(
        mean_lanes, max_action * tanh_h,
        jnp.where(std_lanes, e,
                  jnp.where(value_lane, head, 0.0)))


def init_params(key, state_dim, action_dim):
    """Deterministic init matching the PyTorch module (weights pre-transposed
    to [in, out]); matmul weights stored bf16, branch/head weights fused."""
    assert 2 * action_dim + 1 <= HEAD_WIDTH

    def linear(k, fan_in, fan_out):
        k1, k2 = jax.random.split(k)
        bound = 1.0 / (fan_in ** 0.5)
        w = jax.random.uniform(k1, (fan_in, fan_out), jnp.float32, -bound, bound)
        b = jax.random.uniform(k2, (1, fan_out), jnp.float32, -bound, bound)
        return w, b

    def ln(n):
        return jnp.ones((1, n), jnp.float32), jnp.zeros((1, n), jnp.float32)

    ks = jax.random.split(key, 7)
    w1, b1 = linear(ks[0], state_dim, 256)
    g1, be1 = ln(256)
    w2, b2 = linear(ks[1], 256, 256)
    g2, be2 = ln(256)
    wa, ba = linear(ks[2], 256, 128)
    ga, bea = ln(128)
    wm, bm = linear(ks[3], 128, action_dim)
    wls, bls = linear(ks[4], 128, action_dim)
    wc, bc = linear(ks[5], 256, 128)
    gc, bec = ln(128)
    wv, bv = linear(ks[6], 128, 1)

    A = action_dim

    # Fused actor|critic branch weight (256,256): lanes [0:128)=actor, [128:256)=critic.
    wac = jnp.concatenate([wa, wc], axis=1)
    bac = jnp.concatenate([ba, bc], axis=1)

    # Fused head (256,128): rows [0:128) act on the actor half
    # (cols [0:A)=mean, [A:2A)=log_std), rows [128:256) act on the critic half
    # (only col 2A = value weight is nonzero).  Remaining lanes are exactly 0.
    wh2 = jnp.zeros((256, HEAD_WIDTH), jnp.float32)
    wh2 = wh2.at[:128, :A].set(wm).at[:128, A:2 * A].set(wls)
    wh2 = wh2.at[128:, 2 * A].set(wv[:, 0])
    bh2 = jnp.zeros((1, HEAD_WIDTH), jnp.float32)
    bh2 = bh2.at[:, :A].set(bm).at[:, A:2 * A].set(bls)
    bh2 = bh2.at[:, 2 * A].set(bv[0, 0])

    bf16 = jnp.bfloat16
    return (
        w1.astype(bf16), b1, g1, be1,
        w2.astype(bf16), b2, g2, be2,
        wac.astype(bf16), bac, ga, bea, gc, bec,
        wh2.astype(bf16), bh2,
    )


def actor_critic_forward(state, params, max_action, action_dim):
    single_sample = state.ndim == 1
    if single_sample:
        state = state[None, :]
    batch, state_dim = state.shape
    assert 2 * action_dim + 1 <= HEAD_WIDTH

    # Batch tile: as large as 1024 rows so the ~0.35us/step grid overhead
    # amortizes (VMEM use stays far under the scoped limit on every gen).
    tb = min(1024, _round_up(max(batch, 1), 8))
    padded_batch = _round_up(batch, tb)
    # v7x megacore: make sure mid/large batches produce >= 2 parallel grid
    # steps so both TensorCores get work (one extra ~0.35us step on v5e/v6e).
    if padded_batch == tb and padded_batch >= 256:
        tb = _round_up((padded_batch + 1) // 2, 8)
        padded_batch = _round_up(batch, tb)

    if padded_batch != batch:
        state = jnp.pad(state, ((0, padded_batch - batch), (0, 0)))

    grid = (padded_batch // tb,)

    def resident(arr):
        # Full-array block, constant index_map: stays resident across the grid.
        # TODO(synk): pipeline_mode=pl.Buffered(1) would halve weight VMEM; kept
        # default-buffered for maximum lowering compatibility.
        return pl.BlockSpec(arr.shape, lambda i: (0,) * arr.ndim)

    in_specs = [pl.BlockSpec((tb, state_dim), lambda i: (i, 0))]
    in_specs += [resident(p) for p in params]

    packed = pl.pallas_call(
        functools.partial(_actor_critic_kernel,
                          max_action=float(max_action),
                          action_dim=action_dim),
        out_shape=jax.ShapeDtypeStruct((padded_batch, HEAD_WIDTH), jnp.float32),
        grid=grid,
        in_specs=in_specs,
        out_specs=pl.BlockSpec((tb, HEAD_WIDTH), lambda i: (i, 0)),
        compiler_params=pltpu.CompilerParams(
            dimension_semantics=("parallel",)),
    )(state, *params)

    A = action_dim
    # NOTE: these slices re-read the packed slab; for large batches prefer to
    # consume `packed` directly downstream to avoid the extra HBM pass.
    mean = packed[:batch, :A]
    std = packed[:batch, A:2 * A]
    value = packed[:batch, 2 * A:2 * A + 1]

    if single_sample:
        mean, std, value = mean[0], std[0], value[0]
    return mean, std, value


def _reference_forward(state, params, max_action, action_dim):
    """Pure-JAX reference (same bf16-weight matmuls, exact tanh/exp)."""
    (w1, b1, g1, be1, w2, b2, g2, be2,
     wac, bac, ga, bea, gc, bec, wh2, bh2) = params
    A = action_dim
    x = jnp.maximum(_layernorm(_dot_bf16(state, w1) + b1, g1, be1), 0.0)
    x = jnp.maximum(_layernorm(_dot_bf16(x, w2) + b2, g2, be2), 0.0)
    acx = _dot_bf16(x, wac) + bac
    a_half = jnp.maximum(_layernorm(acx[:, :128], ga, bea), 0.0)
    c_half = jnp.maximum(_layernorm(acx[:, 128:], gc, bec), 0.0)
    head = _dot_bf16(jnp.concatenate([a_half, c_half], axis=-1), wh2) + bh2
    mean = jnp.tanh(head[:, :A]) * max_action
    std = jnp.exp(jnp.clip(head[:, A:2 * A], -20.0, 2.0))
    value = head[:, 2 * A:2 * A + 1]
    return mean, std, value


if __name__ == "__main__":
    state_dim = 8
    action_dim = 4
    max_action = 1.0
    batch = 2

    key = jax.random.PRNGKey(0)
    k_params, k_state = jax.random.split(key)
    params = init_params(k_params, state_dim, action_dim)
    state = jax.random.normal(k_state, (batch, state_dim), jnp.float32)

    mean, std, value = actor_critic_forward(state, params, max_action, action_dim)
    jax.block_until_ready((mean, std, value))

    # correctness check against pure-JAX reference (bf16 weights => loose tol)
    ref_mean, ref_std, ref_value = _reference_forward(state, params, max_action,
                                                      action_dim)
    assert jnp.allclose(mean, ref_mean, atol=1e-2, rtol=1e-2), "mean mismatch"
    assert jnp.allclose(std, ref_std, atol=1e-2, rtol=1e-2), "std mismatch"
    assert jnp.allclose(value, ref_value, atol=1e-2, rtol=1e-2), "value mismatch"

    assert mean.shape == (batch, action_dim)
    assert std.shape == (batch, action_dim)
    assert value.shape == (batch, 1)

    # single-sample path
    m1, s1, v1 = actor_critic_forward(state[0], params, max_action, action_dim)
    jax.block_until_ready((m1, s1, v1))
    assert m1.shape == (action_dim,) and v1.shape == (1,)

    # multi-tile (grid >= 2, ragged batch) path
    big = 272
    state_big = jax.random.normal(jax.random.PRNGKey(1), (big, state_dim),
                                  jnp.float32)
    mb, sb, vb = actor_critic_forward(state_big, params, max_action, action_dim)
    jax.block_until_ready((mb, sb, vb))
    rmb, rsb, rvb = _reference_forward(state_big, params, max_action, action_dim)
    assert jnp.allclose(mb, rmb, atol=1e-2, rtol=1e-2), "big mean mismatch"
    assert jnp.allclose(sb, rsb, atol=1e-2, rtol=1e-2), "big std mismatch"
    assert jnp.allclose(vb, rvb, atol=1e-2, rtol=1e-2), "big value mismatch"

    print("KERNEL_OK")
</pallas_src>

<mosaic_0001>
module attributes {stable_mosaic.version = 11 : i64} {
  func.func @_actor_critic_kernel(%arg0: i32, %arg1: memref<8x8xf32, #tpu.memory_space<vmem>>, %arg2: memref<8x256xbf16, #tpu.memory_space<vmem>>, %arg3: memref<1x256xf32, #tpu.memory_space<vmem>>, %arg4: memref<1x256xf32, #tpu.memory_space<vmem>>, %arg5: memref<1x256xf32, #tpu.memory_space<vmem>>, %arg6: memref<256x256xbf16, #tpu.memory_space<vmem>>, %arg7: memref<1x256xf32, #tpu.memory_space<vmem>>, %arg8: memref<1x256xf32, #tpu.memory_space<vmem>>, %arg9: memref<1x256xf32, #tpu.memory_space<vmem>>, %arg10: memref<256x256xbf16, #tpu.memory_space<vmem>>, %arg11: memref<1x256xf32, #tpu.memory_space<vmem>>, %arg12: memref<1x128xf32, #tpu.memory_space<vmem>>, %arg13: memref<1x128xf32, #tpu.memory_space<vmem>>, %arg14: memref<1x128xf32, #tpu.memory_space<vmem>>, %arg15: memref<1x128xf32, #tpu.memory_space<vmem>>, %arg16: memref<256x128xbf16, #tpu.memory_space<vmem>>, %arg17: memref<1x128xf32, #tpu.memory_space<vmem>>, %arg18: memref<8x128xf32, #tpu.memory_space<vmem>>) attributes {dimension_semantics = [#tpu.dimension_semantics<parallel>], iteration_bounds = array<i64: 1>, scalar_prefetch = 0 : i64, scratch_operands = 0 : i64, tpu.core_type = #tpu.core_type<tc>, window_params = [{transform_indices = @transform_0, window_bounds = array<i64: 8, 8>}, {pipeline_mode = #tpu.pipeline_mode<synchronous>, transform_indices = @transform_1, window_bounds = array<i64: 8, 256>}, {pipeline_mode = #tpu.pipeline_mode<synchronous>, transform_indices = @transform_2, window_bounds = array<i64: 1, 256>}, {pipeline_mode = #tpu.pipeline_mode<synchronous>, transform_indices = @transform_3, window_bounds = array<i64: 1, 256>}, {pipeline_mode = #tpu.pipeline_mode<synchronous>, transform_indices = @transform_4, window_bounds = array<i64: 1, 256>}, {pipeline_mode = #tpu.pipeline_mode<synchronous>, transform_indices = @transform_5, window_bounds = array<i64: 256, 256>}, {pipeline_mode = #tpu.pipeline_mode<synchronous>, transform_indices = @transform_6, window_bounds = array<i64: 1, 256>}, {pipeline_mode = #tpu.pipeline_mode<synchronous>, transform_indices = @transform_7, window_bounds = array<i64: 1, 256>}, {pipeline_mode = #tpu.pipeline_mode<synchronous>, transform_indices = @transform_8, window_bounds = array<i64: 1, 256>}, {pipeline_mode = #tpu.pipeline_mode<synchronous>, transform_indices = @transform_9, window_bounds = array<i64: 256, 256>}, {pipeline_mode = #tpu.pipeline_mode<synchronous>, transform_indices = @transform_10, window_bounds = array<i64: 1, 256>}, {pipeline_mode = #tpu.pipeline_mode<synchronous>, transform_indices = @transform_11, window_bounds = array<i64: 1, 128>}, {pipeline_mode = #tpu.pipeline_mode<synchronous>, transform_indices = @transform_12, window_bounds = array<i64: 1, 128>}, {pipeline_mode = #tpu.pipeline_mode<synchronous>, transform_indices = @transform_13, window_bounds = array<i64: 1, 128>}, {pipeline_mode = #tpu.pipeline_mode<synchronous>, transform_indices = @transform_14, window_bounds = array<i64: 1, 128>}, {pipeline_mode = #tpu.pipeline_mode<synchronous>, transform_indices = @transform_15, window_bounds = array<i64: 256, 128>}, {pipeline_mode = #tpu.pipeline_mode<synchronous>, transform_indices = @transform_16, window_bounds = array<i64: 1, 128>}, {transform_indices = @transform_17, window_bounds = array<i64: 8, 128>}]} {
    %c0 = arith.constant 0 : index
    %c0_0 = arith.constant 0 : index
    %0 = vector.load %arg1[%c0, %c0_0] : memref<8x8xf32, #tpu.memory_space<vmem>>, vector<8x8xf32>
    %c0_1 = arith.constant 0 : index
    %c0_2 = arith.constant 0 : index
    %1 = vector.load %arg2[%c0_1, %c0_2] : memref<8x256xbf16, #tpu.memory_space<vmem>>, vector<8x256xbf16>
    %2 = arith.truncf %0 : vector<8x8xf32> to vector<8x8xbf16>
    %cst = arith.constant dense<0.000000e+00> : vector<8x256xf32>
    %3 = tpu.matmul %2, %1, %cst {dimension_numbers = #tpu.dot_dimension_numbers<[1], [0], [0], [1], [0, 0, 1, 1], [], []>} : vector<8x8xbf16>, vector<8x256xbf16>, vector<8x256xf32> -> vector<8x256xf32>
    %c0_3 = arith.constant 0 : index
    %c0_4 = arith.constant 0 : index
    %4 = vector.load %arg3[%c0_3, %c0_4] : memref<1x256xf32, #tpu.memory_space<vmem>>, vector<1x256xf32>
    %5 = vector.broadcast %4 : vector<1x256xf32> to vector<8x256xf32>
    %6 = arith.addf %3, %5 : vector<8x256xf32>
    %c0_5 = arith.constant 0 : index
    %c0_6 = arith.constant 0 : index
    %7 = vector.load %arg4[%c0_5, %c0_6] : memref<1x256xf32, #tpu.memory_space<vmem>>, vector<1x256xf32>
    %c0_7 = arith.constant 0 : index
    %c0_8 = arith.constant 0 : index
    %8 = vector.load %arg5[%c0_7, %c0_8] : memref<1x256xf32, #tpu.memory_space<vmem>>, vector<1x256xf32>
    %cst_9 = arith.constant dense<0.000000e+00> : vector<8xf32>
    %9 = vector.multi_reduction <add>, %6, %cst_9 [1] : vector<8x256xf32> to vector<8xf32>
    %10 = vector.shape_cast %9 : vector<8xf32> to vector<8x1xf32>
    %cst_10 = arith.constant 2.560000e+02 : f32
    %11 = vector.broadcast %cst_10 : f32 to vector<8x1xf32>
    %12 = arith.divf %10, %11 : vector<8x1xf32>
    %13 = vector.broadcast %12 : vector<8x1xf32> to vector<8x256xf32>
    %14 = arith.subf %6, %13 : vector<8x256xf32>
    %15 = vector.broadcast %12 : vector<8x1xf32> to vector<8x256xf32>
    %16 = arith.subf %6, %15 : vector<8x256xf32>
    %17 = arith.mulf %14, %16 : vector<8x256xf32>
    %cst_11 = arith.constant dense<0.000000e+00> : vector<8xf32>
    %18 = vector.multi_reduction <add>, %17, %cst_11 [1] : vector<8x256xf32> to vector<8xf32>
    %19 = vector.shape_cast %18 : vector<8xf32> to vector<8x1xf32>
    %cst_12 = arith.constant 2.560000e+02 : f32
    %20 = vector.broadcast %cst_12 : f32 to vector<8x1xf32>
    %21 = arith.divf %19, %20 : vector<8x1xf32>
    %22 = vector.broadcast %12 : vector<8x1xf32> to vector<8x256xf32>
    %23 = arith.subf %6, %22 : vector<8x256xf32>
    %cst_13 = arith.constant 9.99999974E-6 : f32
    %24 = vector.broadcast %cst_13 : f32 to vector<8x1xf32>
    %25 = arith.addf %21, %24 : vector<8x1xf32>
    %26 = math.rsqrt %25 : vector<8x1xf32>
    %27 = vector.broadcast %26 : vector<8x1xf32> to vector<8x256xf32>
    %28 = arith.mulf %23, %27 : vector<8x256xf32>
    %29 = vector.broadcast %7 : vector<1x256xf32> to vector<8x256xf32>
    %30 = arith.mulf %28, %29 : vector<8x256xf32>
    %31 = vector.broadcast %8 : vector<1x256xf32> to vector<8x256xf32>
    %32 = arith.addf %30, %31 : vector<8x256xf32>
    %cst_14 = arith.constant 0.000000e+00 : f32
    %33 = vector.broadcast %cst_14 : f32 to vector<8x256xf32>
    %34 = arith.maximumf %32, %33 : vector<8x256xf32>
    %c0_15 = arith.constant 0 : index
    %c0_16 = arith.constant 0 : index
    %35 = vector.load %arg6[%c0_15, %c0_16] : memref<256x256xbf16, #tpu.memory_space<vmem>>, vector<256x256xbf16>
    %36 = arith.truncf %34 : vector<8x256xf32> to vector<8x256xbf16>
    %cst_17 = arith.constant dense<0.000000e+00> : vector<8x256xf32>
    %37 = tpu.matmul %36, %35, %cst_17 {dimension_numbers = #tpu.dot_dimension_numbers<[1], [0], [0], [1], [0, 0, 1, 1], [], []>} : vector<8x256xbf16>, vector<256x256xbf16>, vector<8x256xf32> -> vector<8x256xf32>
    %c0_18 = arith.constant 0 : index
    %c0_19 = arith.constant 0 : index
    %38 = vector.load %arg7[%c0_18, %c0_19] : memref<1x256xf32, #tpu.memory_space<vmem>>, vector<1x256xf32>
    %39 = vector.broadcast %38 : vector<1x256xf32> to vector<8x256xf32>
    %40 = arith.addf %37, %39 : vector<8x256xf32>
    %c0_20 = arith.constant 0 : index
    %c0_21 = arith.constant 0 : index
    %41 = vector.load %arg8[%c0_20, %c0_21] : memref<1x256xf32, #tpu.memory_space<vmem>>, vector<1x256xf32>
    %c0_22 = arith.constant 0 : index
    %c0_23 = arith.constant 0 : index
    %42 = vector.load %arg9[%c0_22, %c0_23] : memref<1x256xf32, #tpu.memory_space<vmem>>, vector<1x256xf32>
    %cst_24 = arith.constant dense<0.000000e+00> : vector<8xf32>
    %43 = vector.multi_reduction <add>, %40, %cst_24 [1] : vector<8x256xf32> to vector<8xf32>
    %44 = vector.shape_cast %43 : vector<8xf32> to vector<8x1xf32>
    %cst_25 = arith.constant 2.560000e+02 : f32
    %45 = vector.broadcast %cst_25 : f32 to vector<8x1xf32>
    %46 = arith.divf %44, %45 : vector<8x1xf32>
    %47 = vector.broadcast %46 : vector<8x1xf32> to vector<8x256xf32>
    %48 = arith.subf %40, %47 : vector<8x256xf32>
    %49 = vector.broadcast %46 : vector<8x1xf32> to vector<8x256xf32>
    %50 = arith.subf %40, %49 : vector<8x256xf32>
    %51 = arith.mulf %48, %50 : vector<8x256xf32>
    %cst_26 = arith.constant dense<0.000000e+00> : vector<8xf32>
    %52 = vector.multi_reduction <add>, %51, %cst_26 [1] : vector<8x256xf32> to vector<8xf32>
    %53 = vector.shape_cast %52 : vector<8xf32> to vector<8x1xf32>
    %cst_27 = arith.constant 2.560000e+02 : f32
    %54 = vector.broadcast %cst_27 : f32 to vector<8x1xf32>
    %55 = arith.divf %53, %54 : vector<8x1xf32>
    %56 = vector.broadcast %46 : vector<8x1xf32> to vector<8x256xf32>
    %57 = arith.subf %40, %56 : vector<8x256xf32>
    %cst_28 = arith.constant 9.99999974E-6 : f32
    %58 = vector.broadcast %cst_28 : f32 to vector<8x1xf32>
    %59 = arith.addf %55, %58 : vector<8x1xf32>
    %60 = math.rsqrt %59 : vector<8x1xf32>
    %61 = vector.broadcast %60 : vector<8x1xf32> to vector<8x256xf32>
    %62 = arith.mulf %57, %61 : vector<8x256xf32>
    %63 = vector.broadcast %41 : vector<1x256xf32> to vector<8x256xf32>
    %64 = arith.mulf %62, %63 : vector<8x256xf32>
    %65 = vector.broadcast %42 : vector<1x256xf32> to vector<8x256xf32>
    %66 = arith.addf %64, %65 : vector<8x256xf32>
    %cst_29 = arith.constant 0.000000e+00 : f32
    %67 = vector.broadcast %cst_29 : f32 to vector<8x256xf32>
    %68 = arith.maximumf %66, %67 : vector<8x256xf32>
    %c0_30 = arith.constant 0 : index
    %c0_31 = arith.constant 0 : index
    %69 = vector.load %arg10[%c0_30, %c0_31] : memref<256x256xbf16, #tpu.memory_space<vmem>>, vector<256x256xbf16>
    %70 = arith.truncf %68 : vector<8x256xf32> to vector<8x256xbf16>
    %cst_32 = arith.constant dense<0.000000e+00> : vector<8x256xf32>
    %71 = tpu.matmul %70, %69, %cst_32 {dimension_numbers = #tpu.dot_dimension_numbers<[1], [0], [0], [1], [0, 0, 1, 1], [], []>} : vector<8x256xbf16>, vector<256x256xbf16>, vector<8x256xf32> -> vector<8x256xf32>
    %c0_33 = arith.constant 0 : index
    %c0_34 = arith.constant 0 : index
    %72 = vector.load %arg11[%c0_33, %c0_34] : memref<1x256xf32, #tpu.memory_space<vmem>>, vector<1x256xf32>
    %73 = vector.broadcast %72 : vector<1x256xf32> to vector<8x256xf32>
    %74 = arith.addf %71, %73 : vector<8x256xf32>
    %75 = vector.extract_strided_slice %74 {offsets = [0, 0], sizes = [8, 128], strides = [1, 1]} : vector<8x256xf32> to vector<8x128xf32>
    %c0_35 = arith.constant 0 : index
    %c0_36 = arith.constant 0 : index
    %76 = vector.load %arg12[%c0_35, %c0_36] : memref<1x128xf32, #tpu.memory_space<vmem>>, vector<1x128xf32>
    %c0_37 = arith.constant 0 : index
    %c0_38 = arith.constant 0 : index
    %77 = vector.load %arg13[%c0_37, %c0_38] : memref<1x128xf32, #tpu.memory_space<vmem>>, vector<1x128xf32>
    %cst_39 = arith.constant dense<0.000000e+00> : vector<8xf32>
    %78 = vector.multi_reduction <add>, %75, %cst_39 [1] : vector<8x128xf32> to vector<8xf32>
    %79 = vector.shape_cast %78 : vector<8xf32> to vector<8x1xf32>
    %cst_40 = arith.constant 1.280000e+02 : f32
    %80 = vector.broadcast %cst_40 : f32 to vector<8x1xf32>
    %81 = arith.divf %79, %80 : vector<8x1xf32>
    %82 = vector.broadcast %81 : vector<8x1xf32> to vector<8x128xf32>
    %83 = arith.subf %75, %82 : vector<8x128xf32>
    %84 = vector.broadcast %81 : vector<8x1xf32> to vector<8x128xf32>
    %85 = arith.subf %75, %84 : vector<8x128xf32>
    %86 = arith.mulf %83, %85 : vector<8x128xf32>
    %cst_41 = arith.constant dense<0.000000e+00> : vector<8xf32>
    %87 = vector.multi_reduction <add>, %86, %cst_41 [1] : vector<8x128xf32> to vector<8xf32>
    %88 = vector.shape_cast %87 : vector<8xf32> to vector<8x1xf32>
    %cst_42 = arith.constant 1.280000e+02 : f32
    %89 = vector.broadcast %cst_42 : f32 to vector<8x1xf32>
    %90 = arith.divf %88, %89 : vector<8x1xf32>
    %91 = vector.broadcast %81 : vector<8x1xf32> to vector<8x128xf32>
    %92 = arith.subf %75, %91 : vector<8x128xf32>
    %cst_43 = arith.constant 9.99999974E-6 : f32
    %93 = vector.broadcast %cst_43 : f32 to vector<8x1xf32>
    %94 = arith.addf %90, %93 : vector<8x1xf32>
    %95 = math.rsqrt %94 : vector<8x1xf32>
    %96 = vector.broadcast %95 : vector<8x1xf32> to vector<8x128xf32>
    %97 = arith.mulf %92, %96 : vector<8x128xf32>
    %98 = vector.broadcast %76 : vector<1x128xf32> to vector<8x128xf32>
    %99 = arith.mulf %97, %98 : vector<8x128xf32>
    %100 = vector.broadcast %77 : vector<1x128xf32> to vector<8x128xf32>
    %101 = arith.addf %99, %100 : vector<8x128xf32>
    %cst_44 = arith.constant 0.000000e+00 : f32
    %102 = vector.broadcast %cst_44 : f32 to vector<8x128xf32>
    %103 = arith.maximumf %101, %102 : vector<8x128xf32>
    %104 = vector.extract_strided_slice %74 {offsets = [0, 128], sizes = [8, 128], strides = [1, 1]} : vector<8x256xf32> to vector<8x128xf32>
    %c0_45 = arith.constant 0 : index
    %c0_46 = arith.constant 0 : index
    %105 = vector.load %arg14[%c0_45, %c0_46] : memref<1x128xf32, #tpu.memory_space<vmem>>, vector<1x128xf32>
    %c0_47 = arith.constant 0 : index
    %c0_48 = arith.constant 0 : index
    %106 = vector.load %arg15[%c0_47, %c0_48] : memref<1x128xf32, #tpu.memory_space<vmem>>, vector<1x128xf32>
    %cst_49 = arith.constant dense<0.000000e+00> : vector<8xf32>
    %107 = vector.multi_reduction <add>, %104, %cst_49 [1] : vector<8x128xf32> to vector<8xf32>
    %108 = vector.shape_cast %107 : vector<8xf32> to vector<8x1xf32>
    %cst_50 = arith.constant 1.280000e+02 : f32
    %109 = vector.broadcast %cst_50 : f32 to vector<8x1xf32>
    %110 = arith.divf %108, %109 : vector<8x1xf32>
    %111 = vector.broadcast %110 : vector<8x1xf32> to vector<8x128xf32>
    %112 = arith.subf %104, %111 : vector<8x128xf32>
    %113 = vector.broadcast %110 : vector<8x1xf32> to vector<8x128xf32>
    %114 = arith.subf %104, %113 : vector<8x128xf32>
    %115 = arith.mulf %112, %114 : vector<8x128xf32>
    %cst_51 = arith.constant dense<0.000000e+00> : vector<8xf32>
    %116 = vector.multi_reduction <add>, %115, %cst_51 [1] : vector<8x128xf32> to vector<8xf32>
    %117 = vector.shape_cast %116 : vector<8xf32> to vector<8x1xf32>
    %cst_52 = arith.constant 1.280000e+02 : f32
    %118 = vector.broadcast %cst_52 : f32 to vector<8x1xf32>
    %119 = arith.divf %117, %118 : vector<8x1xf32>
    %120 = vector.broadcast %110 : vector<8x1xf32> to vector<8x128xf32>
    %121 = arith.subf %104, %120 : vector<8x128xf32>
    %cst_53 = arith.constant 9.99999974E-6 : f32
    %122 = vector.broadcast %cst_53 : f32 to vector<8x1xf32>
    %123 = arith.addf %119, %122 : vector<8x1xf32>
    %124 = math.rsqrt %123 : vector<8x1xf32>
    %125 = vector.broadcast %124 : vector<8x1xf32> to vector<8x128xf32>
    %126 = arith.mulf %121, %125 : vector<8x128xf32>
    %127 = vector.broadcast %105 : vector<1x128xf32> to vector<8x128xf32>
    %128 = arith.mulf %126, %127 : vector<8x128xf32>
    %129 = vector.broadcast %106 : vector<1x128xf32> to vector<8x128xf32>
    %130 = arith.addf %128, %129 : vector<8x128xf32>
    %cst_54 = arith.constant 0.000000e+00 : f32
    %131 = vector.broadcast %cst_54 : f32 to vector<8x128xf32>
    %132 = arith.maximumf %130, %131 : vector<8x128xf32>
    %133 = tpu.concatenate %103, %132 in 1 : vector<8x128xf32>, vector<8x128xf32> -> vector<8x256xf32>
    %c0_55 = arith.constant 0 : index
    %c0_56 = arith.constant 0 : index
    %134 = vector.load %arg16[%c0_55, %c0_56] : memref<256x128xbf16, #tpu.memory_space<vmem>>, vector<256x128xbf16>
    %135 = arith.truncf %133 : vector<8x256xf32> to vector<8x256xbf16>
    %cst_57 = arith.constant dense<0.000000e+00> : vector<8x128xf32>
    %136 = tpu.matmul %135, %134, %cst_57 {dimension_numbers = #tpu.dot_dimension_numbers<[1], [0], [0], [1], [0, 0, 1, 1], [], []>} : vector<8x256xbf16>, vector<256x128xbf16>, vector<8x128xf32> -> vector<8x128xf32>
    %c0_58 = arith.constant 0 : index
    %c0_59 = arith.constant 0 : index
    %137 = vector.load %arg17[%c0_58, %c0_59] : memref<1x128xf32, #tpu.memory_space<vmem>>, vector<1x128xf32>
    %138 = vector.broadcast %137 : vector<1x128xf32> to vector<8x128xf32>
    %139 = arith.addf %136, %138 : vector<8x128xf32>
    %140 = tpu.iota {dimensions = array<i32: 1>} : vector<8x128xi32>
    %c4_i32 = arith.constant 4 : i32
    %141 = vector.broadcast %c4_i32 : i32 to vector<8x128xi32>
    %142 = arith.cmpi slt, %140, %141 : vector<8x128xi32>
    %c4_i32_60 = arith.constant 4 : i32
    %143 = vector.broadcast %c4_i32_60 : i32 to vector<8x128xi32>
    %144 = arith.cmpi sge, %140, %143 : vector<8x128xi32>
    %c8_i32 = arith.constant 8 : i32
    %145 = vector.broadcast %c8_i32 : i32 to vector<8x128xi32>
    %146 = arith.cmpi slt, %140, %145 : vector<8x128xi32>
    %147 = arith.andi %144, %146 : vector<8x128xi1>
    %c8_i32_61 = arith.constant 8 : i32
    %148 = vector.broadcast %c8_i32_61 : i32 to vector<8x128xi32>
    %149 = arith.cmpi eq, %140, %148 : vector<8x128xi32>
    %cst_62 = arith.constant 2.000000e+00 : f32
    %150 = vector.broadcast %cst_62 : f32 to vector<8x128xf32>
    %151 = arith.mulf %150, %139 : vector<8x128xf32>
    %cst_63 = arith.constant -6.000000e+01 : f32
    %cst_64 = arith.constant 6.000000e+01 : f32
    %152 = vector.broadcast %cst_63 : f32 to vector<8x128xf32>
    %153 = arith.maximumf %152, %151 : vector<8x128xf32>
    %154 = vector.broadcast %cst_64 : f32 to vector<8x128xf32>
    %155 = arith.minimumf %154, %153 : vector<8x128xf32>
    %cst_65 = arith.constant -2.000000e+01 : f32
    %cst_66 = arith.constant 2.000000e+00 : f32
    %156 = vector.broadcast %cst_65 : f32 to vector<8x128xf32>
    %157 = arith.maximumf %156, %139 : vector<8x128xf32>
    %158 = vector.broadcast %cst_66 : f32 to vector<8x128xf32>
    %159 = arith.minimumf %158, %157 : vector<8x128xf32>
    %160 = arith.select %142, %155, %159 : vector<8x128xi1>, vector<8x128xf32>
    %161 = math.exp %160 : vector<8x128xf32>
    %cst_67 = arith.constant 1.000000e+00 : f32
    %162 = vector.broadcast %cst_67 : f32 to vector<8x128xf32>
    %163 = arith.subf %161, %162 : vector<8x128xf32>
    %cst_68 = arith.constant 1.000000e+00 : f32
    %164 = vector.broadcast %cst_68 : f32 to vector<8x128xf32>
    %165 = arith.addf %161, %164 : vector<8x128xf32>
    %166 = tpu.reciprocal %165 {approx = true} : vector<8x128xf32> -> vector<8x128xf32>
    %167 = arith.mulf %163, %166 : vector<8x128xf32>
    %cst_69 = arith.constant 1.000000e+00 : f32
    %168 = vector.broadcast %cst_69 : f32 to vector<8x128xf32>
    %169 = arith.mulf %168, %167 : vector<8x128xf32>
    %cst_70 = arith.constant 0.000000e+00 : f32
    %170 = vector.broadcast %cst_70 : f32 to vector<8x128xf32>
    %171 = arith.select %149, %139, %170 : vector<8x128xi1>, vector<8x128xf32>
    %172 = arith.select %147, %161, %171 : vector<8x128xi1>, vector<8x128xf32>
    %173 = arith.select %142, %169, %172 : vector<8x128xi1>, vector<8x128xf32>
    %c0_71 = arith.constant 0 : index
    %c0_72 = arith.constant 0 : index
    %174 = vector.load %arg18[%c0_71, %c0_72] : memref<8x128xf32, #tpu.memory_space<vmem>>, vector<8x128xf32>
    tpu.vector_store %arg18[%c0_71, %c0_72], %173 {strides = array<i32>} : memref<8x128xf32, #tpu.memory_space<vmem>>, vector<8x128xf32>,
    return
  }
  func.func @transform_0(%arg0: i32) -> (i32, i32) {
    %c0_i32 = arith.constant 0 : i32
    %c0_i32_0 = arith.constant 0 : i32
    return %arg0, %c0_i32 : i32, i32
  }
  func.func @transform_1(%arg0: i32) -> (i32, i32) {
    %c0_i32 = arith.constant 0 : i32
    %c0_i32_0 = arith.constant 0 : i32
    %c0_i32_1 = arith.constant 0 : i32
    return %c0_i32, %c0_i32_0 : i32, i32
  }
  func.func @transform_2(%arg0: i32) -> (i32, i32) {
    %c0_i32 = arith.constant 0 : i32
    %c0_i32_0 = arith.constant 0 : i32
    %c0_i32_1 = arith.constant 0 : i32
    return %c0_i32, %c0_i32_0 : i32, i32
  }
  func.func @transform_3(%arg0: i32) -> (i32, i32) {
    %c0_i32 = arith.constant 0 : i32
    %c0_i32_0 = arith.constant 0 : i32
    %c0_i32_1 = arith.constant 0 : i32
    return %c0_i32, %c0_i32_0 : i32, i32
  }
  func.func @transform_4(%arg0: i32) -> (i32, i32) {
    %c0_i32 = arith.constant 0 : i32
    %c0_i32_0 = arith.constant 0 : i32
    %c0_i32_1 = arith.constant 0 : i32
    return %c0_i32, %c0_i32_0 : i32, i32
  }
  func.func @transform_5(%arg0: i32) -> (i32, i32) {
    %c0_i32 = arith.constant 0 : i32
    %c0_i32_0 = arith.constant 0 : i32
    %c0_i32_1 = arith.constant 0 : i32
    return %c0_i32, %c0_i32_0 : i32, i32
  }
  func.func @transform_6(%arg0: i32) -> (i32, i32) {
    %c0_i32 = arith.constant 0 : i32
    %c0_i32_0 = arith.constant 0 : i32
    %c0_i32_1 = arith.constant 0 : i32
    return %c0_i32, %c0_i32_0 : i32, i32
  }
  func.func @transform_7(%arg0: i32) -> (i32, i32) {
    %c0_i32 = arith.constant 0 : i32
    %c0_i32_0 = arith.constant 0 : i32
    %c0_i32_1 = arith.constant 0 : i32
    return %c0_i32, %c0_i32_0 : i32, i32
  }
  func.func @transform_8(%arg0: i32) -> (i32, i32) {
    %c0_i32 = arith.constant 0 : i32
    %c0_i32_0 = arith.constant 0 : i32
    %c0_i32_1 = arith.constant 0 : i32
    return %c0_i32, %c0_i32_0 : i32, i32
  }
  func.func @transform_9(%arg0: i32) -> (i32, i32) {
    %c0_i32 = arith.constant 0 : i32
    %c0_i32_0 = arith.constant 0 : i32
    %c0_i32_1 = arith.constant 0 : i32
    return %c0_i32, %c0_i32_0 : i32, i32
  }
  func.func @transform_10(%arg0: i32) -> (i32, i32) {
    %c0_i32 = arith.constant 0 : i32
    %c0_i32_0 = arith.constant 0 : i32
    %c0_i32_1 = arith.constant 0 : i32
    return %c0_i32, %c0_i32_0 : i32, i32
  }
  func.func @transform_11(%arg0: i32) -> (i32, i32) {
    %c0_i32 = arith.constant 0 : i32
    %c0_i32_0 = arith.constant 0 : i32
    %c0_i32_1 = arith.constant 0 : i32
    return %c0_i32, %c0_i32_0 : i32, i32
  }
  func.func @transform_12(%arg0: i32) -> (i32, i32) {
    %c0_i32 = arith.constant 0 : i32
    %c0_i32_0 = arith.constant 0 : i32
    %c0_i32_1 = arith.constant 0 : i32
    return %c0_i32, %c0_i32_0 : i32, i32
  }
  func.func @transform_13(%arg0: i32) -> (i32, i32) {
    %c0_i32 = arith.constant 0 : i32
    %c0_i32_0 = arith.constant 0 : i32
    %c0_i32_1 = arith.constant 0 : i32
    return %c0_i32, %c0_i32_0 : i32, i32
  }
  func.func @transform_14(%arg0: i32) -> (i32, i32) {
    %c0_i32 = arith.constant 0 : i32
    %c0_i32_0 = arith.constant 0 : i32
    %c0_i32_1 = arith.constant 0 : i32
    return %c0_i32, %c0_i32_0 : i32, i32
  }
  func.func @transform_15(%arg0: i32) -> (i32, i32) {
    %c0_i32 = arith.constant 0 : i32
    %c0_i32_0 = arith.constant 0 : i32
    %c0_i32_1 = arith.constant 0 : i32
    return %c0_i32, %c0_i32_0 : i32, i32
  }
  func.func @transform_16(%arg0: i32) -> (i32, i32) {
    %c0_i32 = arith.constant 0 : i32
    %c0_i32_0 = arith.constant 0 : i32
    %c0_i32_1 = arith.constant 0 : i32
    return %c0_i32, %c0_i32_0 : i32, i32
  }
  func.func @transform_17(%arg0: i32) -> (i32, i32) {
    %c0_i32 = arith.constant 0 : i32
    %c0_i32_0 = arith.constant 0 : i32
    return %arg0, %c0_i32 : i32, i32
  }
}

</mosaic_0001>

<llo_original>
// kernel: tpu_custom_call.1
$region0: #{tpu_custom_call.1}
  #allocation0 [shape = 'u32[]', space=smem, size = 0x4, offset = 0x4, fixed_abs, tag = 'smem constant byte address 0x4 - core index']
  #allocation1 [shape = 'u32[144,128]{1,0:T(1,128)}', space=vmem, size = 0x12000, scoped, tag = 'internal scratch']
  %s0 = inlined_call_operand.hbm [shape: f32[8,8], index: 0, kind: input, shape index: {}]
  %s1 = inlined_call_operand.hbm [shape: bf16[8,256], index: 1, kind: input, shape index: {}]
  %s2 = inlined_call_operand.vmem [shape: f32[1,256], index: 2, kind: input, shape index: {}]
  %s3 = inlined_call_operand.vmem [shape: f32[1,256], index: 3, kind: input, shape index: {}]
  %s4 = inlined_call_operand.vmem [shape: f32[1,256], index: 4, kind: input, shape index: {}]
  %s5 = inlined_call_operand.hbm [shape: bf16[256,256], index: 5, kind: input, shape index: {}]
  %s6 = inlined_call_operand.vmem [shape: f32[1,256], index: 6, kind: input, shape index: {}]
  %s7 = inlined_call_operand.vmem [shape: f32[1,256], index: 7, kind: input, shape index: {}]
  %s8 = inlined_call_operand.vmem [shape: f32[1,256], index: 8, kind: input, shape index: {}]
  %s9 = inlined_call_operand.hbm [shape: bf16[256,256], index: 9, kind: input, shape index: {}]
  %s10 = inlined_call_operand.vmem [shape: f32[1,256], index: 10, kind: input, shape index: {}]
  %s11 = inlined_call_operand.vmem [shape: f32[1,128], index: 11, kind: input, shape index: {}]
  %s12 = inlined_call_operand.vmem [shape: f32[1,128], index: 12, kind: input, shape index: {}]
  %s13 = inlined_call_operand.vmem [shape: f32[1,128], index: 13, kind: input, shape index: {}]
  %s14 = inlined_call_operand.vmem [shape: f32[1,128], index: 14, kind: input, shape index: {}]
  %s15 = inlined_call_operand.hbm [shape: bf16[256,128], index: 15, kind: input, shape index: {}]
  %s16 = inlined_call_operand.vmem [shape: f32[1,128], index: 16, kind: input, shape index: {}]
  %s17 = inlined_call_operand.hbm [shape: f32[8,128], index: 17, kind: output, shape index: {}]
  %s18 = sld [smem:[#allocation0]]
  $region98: #{tpu_custom_call.1} parent=0
    _
  %s20 = ssub.s32 1, %s18
  %s21 = scalar_select 0, %s20, %s18
  $region1: #{tpu_custom_call.1} parent=0
    #allocation2 [shape = 'u8[4096]{0}', space=vmem, size = 0x1000, scoped, tag = 'input window, operand 0, single buffered']
    #allocation3 [shape = 's32[1]{0}', space=sflag, size = 0x4, scoped, tag = 'scoped memory for tpu_custom_call.1']
    #allocation4 [shape = 's32[1]{0}', space=sflag, size = 0x4, scoped, tag = 'scoped memory for tpu_custom_call.1']
    #allocation5 [shape = 'u8[4096]{0}', space=vmem, size = 0x1000, scoped, tag = 'input window, operand 1, single buffered']
    #allocation6 [shape = 's32[1]{0}', space=sflag, size = 0x4, scoped, tag = 'scoped memory for tpu_custom_call.1']
    #allocation7 [shape = 'u8[131072]{0}', space=vmem, size = 0x20000, scoped, tag = 'input window, operand 5, single buffered']
    #allocation8 [shape = 'u8[131072]{0}', space=vmem, size = 0x20000, scoped, tag = 'input window, operand 9, single buffered']
    #allocation9 [shape = 's32[1]{0}', space=sflag, size = 0x4, scoped, tag = 'scoped memory for tpu_custom_call.1']
    #allocation10 [shape = 'u8[65536]{0}', space=vmem, size = 0x10000, scoped, tag = 'input window, operand 15, single buffered']
    #allocation11 [shape = 'u8[4096]{0}', space=vmem, size = 0x1000, scoped, tag = 'output window, operand 0, single buffered']
    %22 = vsyncpa [#allocation3], 0
    %23 = vsyncpa [#allocation6], 0
    %24 = vsyncpa [#allocation9], 0
    %25 = vsyncpa [#allocation4], 0
    // Predicated region
    $region2: #{tpu_custom_call.1} parent=1 // pred_check
      _
    $region3: #{tpu_custom_call.1} parent=1 // pred_check_branch
      %27 = sbr.rel (0) target = $region5
    $region4: #{tpu_custom_call.1} parent=1 // pred_region
      %s29 = ssub.s32 128, 128
      %30 = vsyncadd [#allocation3], %s29
      %s32 = sshll.u32 [#allocation2], 4
      %s33 = int_to_ptr.vmem [resolvable:$true] %s32
      %35 = dma.hbm_to_vmem [thread:$0]  %s0, 128, %s33, [#allocation3]
    $region5: #{tpu_custom_call.1} parent=1 // pred_fallthru
      _
    // Predicated region
    $region6: #{tpu_custom_call.1} parent=1 // pred_check
      _
    $region7: #{tpu_custom_call.1} parent=1 // pred_check_branch
      %37 = sbr.rel (0) target = $region9
    $region8: #{tpu_custom_call.1} parent=1 // pred_region
      %s39 = ssub.s32 128, 128
      %40 = vsyncadd [#allocation6], %s39
      %s42 = sshll.u32 [#allocation5], 4
      %s43 = int_to_ptr.vmem [resolvable:$true] %s42
      %45 = dma.hbm_to_vmem [thread:$0]  %s1, 128, %s43, [#allocation6]
    $region9: #{tpu_custom_call.1} parent=1 // pred_fallthru
      _
    // Predicated region
    $region10: #{tpu_custom_call.1} parent=1 // pred_check
      _
    $region11: #{tpu_custom_call.1} parent=1 // pred_check_branch
      %47 = sbr.rel (0) target = $region13
    $region12: #{tpu_custom_call.1} parent=1 // pred_region
      _
    $region13: #{tpu_custom_call.1} parent=1 // pred_fallthru
      _
    // Predicated region
    $region14: #{tpu_custom_call.1} parent=1 // pred_check
      _
    $region15: #{tpu_custom_call.1} parent=1 // pred_check_branch
      %49 = sbr.rel (0) target = $region17
    $region16: #{tpu_custom_call.1} parent=1 // pred_region
      _
    $region17: #{tpu_custom_call.1} parent=1 // pred_fallthru
      _
    // Predicated region
    $region18: #{tpu_custom_call.1} parent=1 // pred_check
      _
    $region19: #{tpu_custom_call.1} parent=1 // pred_check_branch
      %51 = sbr.rel (0) target = $region21
    $region20: #{tpu_custom_call.1} parent=1 // pred_region
      _
    $region21: #{tpu_custom_call.1} parent=1 // pred_fallthru
      _
    // Predicated region
    $region22: #{tpu_custom_call.1} parent=1 // pred_check
      _
    $region23: #{tpu_custom_call.1} parent=1 // pred_check_branch
      %53 = sbr.rel (0) target = $region25
    $region24: #{tpu_custom_call.1} parent=1 // pred_region
      %s55 = ssub.s32 4096, 4096
      %56 = vsyncadd [#allocation6], %s55
      %s57 = sshll.u32 [#allocation7], 4
      %s58 = int_to_ptr.vmem [resolvable:$true] %s57
      %63 = dma.hbm_to_vmem [thread:$0]  %s5, 4096, %s58, [#allocation6], 128, 128, 8
    $region25: #{tpu_custom_call.1} parent=1 // pred_fallthru
      _
    // Predicated region
    $region26: #{tpu_custom_call.1} parent=1 // pred_check
      _
    $region27: #{tpu_custom_call.1} parent=1 // pred_check_branch
      %65 = sbr.rel (0) target = $region29
    $region28: #{tpu_custom_call.1} parent=1 // pred_region
      _
    $region29: #{tpu_custom_call.1} parent=1 // pred_fallthru
      _
    // Predicated region
    $region30: #{tpu_custom_call.1} parent=1 // pred_check
      _
    $region31: #{tpu_custom_call.1} parent=1 // pred_check_branch
      %67 = sbr.rel (0) target = $region33
    $region32: #{tpu_custom_call.1} parent=1 // pred_region
      _
    $region33: #{tpu_custom_call.1} parent=1 // pred_fallthru
      _
    // Predicated region
    $region34: #{tpu_custom_call.1} parent=1 // pred_check
      _
    $region35: #{tpu_custom_call.1} parent=1 // pred_check_branch
      %69 = sbr.rel (0) target = $region37
    $region36: #{tpu_custom_call.1} parent=1 // pred_region
      _
    $region37: #{tpu_custom_call.1} parent=1 // pred_fallthru
      _
    // Predicated region
    $region38: #{tpu_custom_call.1} parent=1 // pred_check
      _
    $region39: #{tpu_custom_call.1} parent=1 // pred_check_branch
      %71 = sbr.rel (0) target = $region41
    $region40: #{tpu_custom_call.1} parent=1 // pred_region
      %s73 = ssub.s32 4096, 4096
      %74 = vsyncadd [#allocation9], %s73
      %s75 = sshll.u32 [#allocation8], 4
      %s76 = int_to_ptr.vmem [resolvable:$true] %s75
      %81 = dma.hbm_to_vmem [thread:$0]  %s9, 4096, %s76, [#allocation9], 128, 128, 8
    $region41: #{tpu_custom_call.1} parent=1 // pred_fallthru
      _
    // Predicated region
    $region42: #{tpu_custom_call.1} parent=1 // pred_check
      _
    $region43: #{tpu_custom_call.1} parent=1 // pred_check_branch
      %83 = sbr.rel (0) target = $region45
    $region44: #{tpu_custom_call.1} parent=1 // pred_region
      _
    $region45: #{tpu_custom_call.1} parent=1 // pred_fallthru
      _
    // Predicated region
    $region46: #{tpu_custom_call.1} parent=1 // pred_check
      _
    $region47: #{tpu_custom_call.1} parent=1 // pred_check_branch
      %85 = sbr.rel (0) target = $region49
    $region48: #{tpu_custom_call.1} parent=1 // pred_region
      _
    $region49: #{tpu_custom_call.1} parent=1 // pred_fallthru
      _
    // Predicated region
    $region50: #{tpu_custom_call.1} parent=1 // pred_check
      _
    $region51: #{tpu_custom_call.1} parent=1 // pred_check_branch
      %87 = sbr.rel (0) target = $region53
    $region52: #{tpu_custom_call.1} parent=1 // pred_region
      _
    $region53: #{tpu_custom_call.1} parent=1 // pred_fallthru
      _
    // Predicated region
    $region54: #{tpu_custom_call.1} parent=1 // pred_check
      _
    $region55: #{tpu_custom_call.1} parent=1 // pred_check_branch
      %89 = sbr.rel (0) target = $region57
    $region56: #{tpu_custom_call.1} parent=1 // pred_region
      _
    $region57: #{tpu_custom_call.1} parent=1 // pred_fallthru
      _
    // Predicated region
    $region58: #{tpu_custom_call.1} parent=1 // pred_check
      _
    $region59: #{tpu_custom_call.1} parent=1 // pred_check_branch
      %91 = sbr.rel (0) target = $region61
    $region60: #{tpu_custom_call.1} parent=1 // pred_region
      _
    $region61: #{tpu_custom_call.1} parent=1 // pred_fallthru
      _
    // Predicated region
    $region62: #{tpu_custom_call.1} parent=1 // pred_check
      _
    $region63: #{tpu_custom_call.1} parent=1 // pred_check_branch
      %93 = sbr.rel (0) target = $region65
    $region64: #{tpu_custom_call.1} parent=1 // pred_region
      %s95 = ssub.s32 2048, 2048
      %96 = vsyncadd [#allocation9], %s95
      %s97 = sshll.u32 [#allocation10], 4
      %s98 = int_to_ptr.vmem [resolvable:$true] %s97
      %103 = dma.hbm_to_vmem [thread:$0]  %s15, 2048, %s98, [#allocation9], 64, 64, 4
    $region65: #{tpu_custom_call.1} parent=1 // pred_fallthru
      _
    // Predicated region
    $region66: #{tpu_custom_call.1} parent=1 // pred_check
      _
    $region67: #{tpu_custom_call.1} parent=1 // pred_check_branch
      %105 = sbr.rel (0) target = $region69
    $region68: #{tpu_custom_call.1} parent=1 // pred_region
      _
    $region69: #{tpu_custom_call.1} parent=1 // pred_fallthru
      _
    // Predicated region
    $region70: #{tpu_custom_call.1} parent=1 // pred_check
      _
    $region71: #{tpu_custom_call.1} parent=1 // pred_check_branch
      %107 = sbr.rel (0) target = $region73
    $region72: #{tpu_custom_call.1} parent=1 // pred_region
      %108 = dma.done [#allocation3], 128
    $region73: #{tpu_custom_call.1} parent=1 // pred_fallthru
      _
    // Predicated region
    $region74: #{tpu_custom_call.1} parent=1 // pred_check
      _
    $region75: #{tpu_custom_call.1} parent=1 // pred_check_branch
      %110 = sbr.rel (0) target = $region77
    $region76: #{tpu_custom_call.1} parent=1 // pred_region
      %111 = dma.done [#allocation6], 128
    $region77: #{tpu_custom_call.1} parent=1 // pred_fallthru
      _
    // Predicated region
    $region78: #{tpu_custom_call.1} parent=1 // pred_check
      _
    $region79: #{tpu_custom_call.1} parent=1 // pred_check_branch
      %113 = sbr.rel (0) target = $region81
    $region80: #{tpu_custom_call.1} parent=1 // pred_region
      %114 = dma.done [#allocation6], 4096
    $region81: #{tpu_custom_call.1} parent=1 // pred_fallthru
      _
    // Predicated region
    $region82: #{tpu_custom_call.1} parent=1 // pred_check
      _
    $region83: #{tpu_custom_call.1} parent=1 // pred_check_branch
      %116 = sbr.rel (0) target = $region85
    $region84: #{tpu_custom_call.1} parent=1 // pred_region
      %117 = dma.done [#allocation9], 4096
    $region85: #{tpu_custom_call.1} parent=1 // pred_fallthru
      _
    // Predicated region
    $region86: #{tpu_custom_call.1} parent=1 // pred_check
      _
    $region87: #{tpu_custom_call.1} parent=1 // pred_check_branch
      %119 = sbr.rel (0) target = $region89
    $region88: #{tpu_custom_call.1} parent=1 // pred_region
      %120 = dma.done [#allocation9], 2048
    $region89: #{tpu_custom_call.1} parent=1 // pred_fallthru
      _
    %v122 = vld [vmem:[#allocation2] sm:$0xff]
    %v123 = vld [vmem:[#allocation5] sm:$0xff]
    %v124 = vpack.c.bf16 %v122, %v122
    %v125 = vld [vmem:[%s2] sm:$0x3]
    %v127 = vlaneseq
    %v128 = vshrl.u32 %v127, 7
    %v129 = vsub.s32 0, %v128
    %v130 = vrot.slane %v125, %v129
    %v131 = vlaneseq
    %v132 = vshrl.u32 %v131, 7
    %v133 = vsub.s32 1, %v132
    %v134 = vrot.slane %v125, %v133
    %v138 = vunpack.c.l.b16 %v123
    %v139 = vunpack.c.h.b16 %v123
    %v140 = vpack.c.b16 %v138, %v138
    %v141 = vpack.c.b16 %v139, %v139
    %vm142 = vcmask 64512
    %v144 = vsel %vm142, %v124, 0
    %vm146 = vcmask 1043456
    %v148 = vsel %vm146, %v140, 0
    %v151 = vsel %vm146, %v141, 0
    %153 = vmatprep.subr.bf16.mxu0 %v151
    %154 = vmatpush1.bf16.msra.mxu0 %v148
    %155 = vmatprep.subr.bf16.mxu0 0
    %156 = vmatpush1.bf16.msra.mxu0 0
    %157 = vmatprep.subr.bf16.mxu0 0
    %158 = vmatpush1.bf16.msra.mxu0 0
    %159 = vmatprep.subr.bf16.mxu0 0
    %160 = vmatpush1.bf16.msra.mxu0 0
    %161 = vmatprep.subr.bf16.mxu0 0
    %162 = vmatpush1.bf16.msra.mxu0 0
    %163 = vmatprep.subr.bf16.mxu0 0
    %164 = vmatpush1.bf16.msra.mxu0 0
    %165 = vmatprep.subr.bf16.mxu0 0
    %166 = vmatpush1.bf16.msra.mxu0 0
    %167 = vmatprep.subr.bf16.mxu0 0
    %168 = vmatpush1.bf16.msra.mxu0 0
    %169 = vmatprep.subr.bf16.mxu0 0
    %170 = vmatpush1.bf16.msra.mxu0 0
    %171 = vmatprep.subr.bf16.mxu0 0
    %172 = vmatpush1.bf16.msra.mxu0 0
    %173 = vmatprep.subr.bf16.mxu0 0
    %174 = vmatpush1.bf16.msra.mxu0 0
    %175 = vmatprep.subr.bf16.mxu0 0
    %176 = vmatpush1.bf16.msra.mxu0 0
    %177 = vmatprep.subr.bf16.mxu0 0
    %178 = vmatpush1.bf16.msra.mxu0 0
    %179 = vmatprep.subr.bf16.mxu0 0
    %180 = vmatpush1.bf16.msra.mxu0 0
    %181 = vmatprep.subr.bf16.mxu0 0
    %182 = vmatpush1.bf16.msra.mxu0 0
    %183 = vmatprep.subr.bf16.mxu0 0
    %184 = vmatpush1.bf16.msra.mxu0 0
    %185 = vmatprep.mubr.bf16.mxu0 0
    %186 = vmatmul.mubr.bf16.gmra.mrb[0].mxu0 %v144
    %v187 = vpop.f32.mrb[0].mxu0
    %v188 = vadd.f32 %v130, %v187
    %v189 = vpop.f32.mrb[0].mxu0
    %v190 = vadd.f32 %v134, %v189
    %v191 = vpop.f32.mrb[0].mxu0
    %v192 = vpop.f32.mrb[0].mxu0
    %193 = vdwg.mxu0
    %v194 = vld [vmem:[%s3] sm:$0x3]
    %v195 = vld [vmem:[%s4] sm:$0x3]
    %v196 = vadd.f32 %v188, %v190
    %197 = vadd.xlane.f32.xlu0 %v196
    %v198 = vpop.xlane.xlu0 %197
    %v199 = vrcp.pop 256.0
    %v200 = vmul.f32 %v198, %v199
    %v201 = vsub.f32 %v188, %v200
    %v202 = vsub.f32 %v190, %v200
    %v203 = vmul.f32 %v201, %v201
    %v204 = vmul.f32 %v202, %v202
    %v205 = vadd.f32 %v203, %v204
    %206 = vadd.xlane.f32.xlu0 %v205
    %v207 = vpop.xlane.xlu0 %206
    %v208 = vmul.f32 %v207, %v199
    %v209 = vadd.f32 %v208, 1e-05
    %v210 = vrsqrt.pop %v209
    %v211 = vmul.f32 %v201, %v210
    %v212 = vmul.f32 %v202, %v210
    %v214 = vlaneseq
    %v215 = vshrl.u32 %v214, 7
    %v216 = vsub.s32 0, %v215
    %v217 = vrot.slane %v194, %v216
    %v218 = vlaneseq
    %v219 = vshrl.u32 %v218, 7
    %v220 = vsub.s32 1, %v219
    %v221 = vrot.slane %v194, %v220
    %v224 = vmul.f32 %v211, %v217
    %v225 = vmul.f32 %v212, %v221
    %v227 = vlaneseq
    %v228 = vshrl.u32 %v227, 7
    %v229 = vsub.s32 0, %v228
    %v230 = vrot.slane %v195, %v229
    %v231 = vlaneseq
    %v232 = vshrl.u32 %v231, 7
    %v233 = vsub.s32 1, %v232
    %v234 = vrot.slane %v195, %v233
    %v237 = vadd.f32 %v224, %v230
    %v238 = vadd.f32 %v225, %v234
    %v239 = vmax.f32 %v237, 0.0
    %v240 = vmax.f32 %v238, 0.0
    %v241 = vld [vmem:[#allocation7] sm:$0xff]
    %v242 = vld [vmem:[#allocation7 + $0x8] sm:$0xff]
    %v243 = vld [vmem:[#allocation7 + $0x10] sm:$0xff]
    %v244 = vld [vmem:[#allocation7 + $0x18] sm:$0xff]
    %v245 = vld [vmem:[#allocation7 + $0x20] sm:$0xff]
    %v246 = vld [vmem:[#allocation7 + $0x28] sm:$0xff]
    %v247 = vld [vmem:[#allocation7 + $0x30] sm:$0xff]
    %v248 = vld [vmem:[#allocation7 + $0x38] sm:$0xff]
    %v249 = vld [vmem:[#allocation7 + $0x40] sm:$0xff]
    %v250 = vld [vmem:[#allocation7 + $0x48] sm:$0xff]
    %v251 = vld [vmem:[#allocation7 + $0x50] sm:$0xff]
    %v252 = vld [vmem:[#allocation7 + $0x58] sm:$0xff]
    %v253 = vld [vmem:[#allocation7 + $0x60] sm:$0xff]
    %v254 = vld [vmem:[#allocation7 + $0x68] sm:$0xff]
    %v255 = vld [vmem:[#allocation7 + $0x70] sm:$0xff]
    %v256 = vld [vmem:[#allocation7 + $0x78] sm:$0xff]
    %v257 = vld [vmem:[#allocation7 + $0x80] sm:$0xff]
    %v258 = vld [vmem:[#allocation7 + $0x88] sm:$0xff]
    %v259 = vld [vmem:[#allocation7 + $0x90] sm:$0xff]
    %v260 = vld [vmem:[#allocation7 + $0x98] sm:$0xff]
    %v261 = vld [vmem:[#allocation7 + $0xa0] sm:$0xff]
    %v262 = vld [vmem:[#allocation7 + $0xa8] sm:$0xff]
    %v263 = vld [vmem:[#allocation7 + $0xb0] sm:$0xff]
    %v264 = vld [vmem:[#allocation7 + $0xb8] sm:$0xff]
    %v265 = vld [vmem:[#allocation7 + $0xc0] sm:$0xff]
    %v266 = vld [vmem:[#allocation7 + $0xc8] sm:$0xff]
    %v267 = vld [vmem:[#allocation7 + $0xd0] sm:$0xff]
    %v268 = vld [vmem:[#allocation7 + $0xd8] sm:$0xff]
    %v269 = vld [vmem:[#allocation7 + $0xe0] sm:$0xff]
    %v270 = vld [vmem:[#allocation7 + $0xe8] sm:$0xff]
    %v271 = vld [vmem:[#allocation7 + $0xf0] sm:$0xff]
    %v272 = vld [vmem:[#allocation7 + $0xf8] sm:$0xff]
    %v273 = vpack.c.bf16 %v239, %v239
    %v274 = vpack.c.bf16 %v240, %v240
    %v275 = vld [vmem:[%s6] sm:$0x3]
    %v277 = vlaneseq
    %v278 = vshrl.u32 %v277, 7
    %v279 = vsub.s32 0, %v278
    %v280 = vrot.slane %v275, %v279
    %v281 = vlaneseq
    %v282 = vshrl.u32 %v281, 7
    %v283 = vsub.s32 1, %v282
    %v284 = vrot.slane %v275, %v283
    %v319 = vunpack.c.l.b16 %v241
    %v320 = vunpack.c.h.b16 %v241
    %v321 = vunpack.c.l.b16 %v242
    %v322 = vunpack.c.h.b16 %v242
    %v323 = vunpack.c.l.b16 %v243
    %v324 = vunpack.c.h.b16 %v243
    %v325 = vunpack.c.l.b16 %v244
    %v326 = vunpack.c.h.b16 %v244
    %v327 = vunpack.c.l.b16 %v245
    %v328 = vunpack.c.h.b16 %v245
    %v329 = vunpack.c.l.b16 %v246
    %v330 = vunpack.c.h.b16 %v246
    %v331 = vunpack.c.l.b16 %v247
    %v332 = vunpack.c.h.b16 %v247
    %v333 = vunpack.c.l.b16 %v248
    %v334 = vunpack.c.h.b16 %v248
    %v335 = vunpack.c.l.b16 %v249
    %v336 = vunpack.c.h.b16 %v249
    %v337 = vunpack.c.l.b16 %v250
    %v338 = vunpack.c.h.b16 %v250
    %v339 = vunpack.c.l.b16 %v251
    %v340 = vunpack.c.h.b16 %v251
    %v341 = vunpack.c.l.b16 %v252
    %v342 = vunpack.c.h.b16 %v252
    %v343 = vunpack.c.l.b16 %v253
    %v344 = vunpack.c.h.b16 %v253
    %v345 = vunpack.c.l.b16 %v254
    %v346 = vunpack.c.h.b16 %v254
    %v347 = vunpack.c.l.b16 %v255
    %v348 = vunpack.c.h.b16 %v255
    %v349 = vunpack.c.l.b16 %v256
    %v350 = vunpack.c.h.b16 %v256
    %v351 = vunpack.c.l.b16 %v257
    %v352 = vunpack.c.h.b16 %v257
    %v353 = vunpack.c.l.b16 %v258
    %v354 = vunpack.c.h.b16 %v258
    %v355 = vunpack.c.l.b16 %v259
    %v356 = vunpack.c.h.b16 %v259
    %v357 = vunpack.c.l.b16 %v260
    %v358 = vunpack.c.h.b16 %v260
    %v359 = vunpack.c.l.b16 %v261
    %v360 = vunpack.c.h.b16 %v261
    %v361 = vunpack.c.l.b16 %v262
    %v362 = vunpack.c.h.b16 %v262
    %v363 = vunpack.c.l.b16 %v263
    %v364 = vunpack.c.h.b16 %v263
    %v365 = vunpack.c.l.b16 %v264
    %v366 = vunpack.c.h.b16 %v264
    %v367 = vunpack.c.l.b16 %v265
    %v368 = vunpack.c.h.b16 %v265
    %v369 = vunpack.c.l.b16 %v266
    %v370 = vunpack.c.h.b16 %v266
    %v371 = vunpack.c.l.b16 %v267
    %v372 = vunpack.c.h.b16 %v267
    %v373 = vunpack.c.l.b16 %v268
    %v374 = vunpack.c.h.b16 %v268
    %v375 = vunpack.c.l.b16 %v269
    %v376 = vunpack.c.h.b16 %v269
    %v377 = vunpack.c.l.b16 %v270
    %v378 = vunpack.c.h.b16 %v270
    %v379 = vunpack.c.l.b16 %v271
    %v380 = vunpack.c.h.b16 %v271
    %v381 = vunpack.c.l.b16 %v272
    %v382 = vunpack.c.h.b16 %v272
    %v383 = vpack.c.b16 %v321, %v319
    %v384 = vpack.c.b16 %v322, %v320
    %v385 = vpack.c.b16 %v325, %v323
    %v386 = vpack.c.b16 %v326, %v324
    %v387 = vpack.c.b16 %v329, %v327
    %v388 = vpack.c.b16 %v330, %v328
    %v389 = vpack.c.b16 %v333, %v331
    %v390 = vpack.c.b16 %v334, %v332
    %v391 = vpack.c.b16 %v337, %v335
    %v392 = vpack.c.b16 %v338, %v336
    %v393 = vpack.c.b16 %v341, %v339
    %v394 = vpack.c.b16 %v342, %v340
    %v395 = vpack.c.b16 %v345, %v343
    %v396 = vpack.c.b16 %v346, %v344
    %v397 = vpack.c.b16 %v349, %v347
    %v398 = vpack.c.b16 %v350, %v348
    %v399 = vpack.c.b16 %v353, %v351
    %v400 = vpack.c.b16 %v354, %v352
    %v401 = vpack.c.b16 %v357, %v355
    %v402 = vpack.c.b16 %v358, %v356
    %v403 = vpack.c.b16 %v361, %v359
    %v404 = vpack.c.b16 %v362, %v360
    %v405 = vpack.c.b16 %v365, %v363
    %v406 = vpack.c.b16 %v366, %v364
    %v407 = vpack.c.b16 %v369, %v367
    %v408 = vpack.c.b16 %v370, %v368
    %v409 = vpack.c.b16 %v373, %v371
    %v410 = vpack.c.b16 %v374, %v372
    %v411 = vpack.c.b16 %v377, %v375
    %v412 = vpack.c.b16 %v378, %v376
    %v413 = vpack.c.b16 %v381, %v379
    %v414 = vpack.c.b16 %v382, %v380
    %447 = vmatprep.subr.bf16.mxu0 %v384
    %448 = vmatpush1.bf16.msra.mxu0 %v383
    %449 = vmatprep.subr.bf16.mxu0 %v386
    %450 = vmatpush1.bf16.msra.mxu0 %v385
    %451 = vmatprep.subr.bf16.mxu0 %v388
    %452 = vmatpush1.bf16.msra.mxu0 %v387
    %453 = vmatprep.subr.bf16.mxu0 %v390
    %454 = vmatpush1.bf16.msra.mxu0 %v389
    %455 = vmatprep.subr.bf16.mxu0 %v392
    %456 = vmatpush1.bf16.msra.mxu0 %v391
    %457 = vmatprep.subr.bf16.mxu0 %v394
    %458 = vmatpush1.bf16.msra.mxu0 %v393
    %459 = vmatprep.subr.bf16.mxu0 %v396
    %460 = vmatpush1.bf16.msra.mxu0 %v395
    %461 = vmatprep.subr.bf16.mxu0 %v398
    %462 = vmatpush1.bf16.msra.mxu0 %v397
    %463 = vmatprep.subr.bf16.mxu0 %v400
    %464 = vmatpush1.bf16.msra.mxu0 %v399
    %465 = vmatprep.subr.bf16.mxu0 %v402
    %466 = vmatpush1.bf16.msra.mxu0 %v401
    %467 = vmatprep.subr.bf16.mxu0 %v404
    %468 = vmatpush1.bf16.msra.mxu0 %v403
    %469 = vmatprep.subr.bf16.mxu0 %v406
    %470 = vmatpush1.bf16.msra.mxu0 %v405
    %471 = vmatprep.subr.bf16.mxu0 %v408
    %472 = vmatpush1.bf16.msra.mxu0 %v407
    %473 = vmatprep.subr.bf16.mxu0 %v410
    %474 = vmatpush1.bf16.msra.mxu0 %v409
    %475 = vmatprep.subr.bf16.mxu0 %v412
    %476 = vmatpush1.bf16.msra.mxu0 %v411
    %477 = vmatprep.subr.bf16.mxu0 %v414
    %478 = vmatpush1.bf16.msra.mxu0 %v413
    %479 = vmatprep.mubr.bf16.mxu0 %v274
    %480 = vmatmul.mubr.bf16.gmra.mrb[0].mxu0 %v273
    %v481 = vpop.f32.mrb[0].mxu0
    %v482 = vadd.f32 %v280, %v481
    %v483 = vpop.f32.mrb[0].mxu0
    %v484 = vadd.f32 %v284, %v483
    %v485 = vpop.f32.mrb[0].mxu0
    %v486 = vpop.f32.mrb[0].mxu0
    %487 = vdwg.mxu0
    %v488 = vld [vmem:[%s7] sm:$0x3]
    %v489 = vld [vmem:[%s8] sm:$0x3]
    %v490 = vadd.f32 %v482, %v484
    %491 = vadd.xlane.f32.xlu0 %v490
    %v492 = vpop.xlane.xlu0 %491
    %v493 = vmul.f32 %v492, %v199
    %v494 = vsub.f32 %v482, %v493
    %v495 = vsub.f32 %v484, %v493
    %v496 = vmul.f32 %v494, %v494
    %v497 = vmul.f32 %v495, %v495
    %v498 = vadd.f32 %v496, %v497
    %499 = vadd.xlane.f32.xlu0 %v498
    %v500 = vpop.xlane.xlu0 %499
    %v501 = vmul.f32 %v500, %v199
    %v502 = vadd.f32 %v501, 1e-05
    %v503 = vrsqrt.pop %v502
    %v504 = vmul.f32 %v494, %v503
    %v505 = vmul.f32 %v495, %v503
    %v507 = vlaneseq
    %v508 = vshrl.u32 %v507, 7
    %v509 = vsub.s32 0, %v508
    %v510 = vrot.slane %v488, %v509
    %v511 = vlaneseq
    %v512 = vshrl.u32 %v511, 7
    %v513 = vsub.s32 1, %v512
    %v514 = vrot.slane %v488, %v513
    %v517 = vmul.f32 %v504, %v510
    %v518 = vmul.f32 %v505, %v514
    %v520 = vlaneseq
    %v521 = vshrl.u32 %v520, 7
    %v522 = vsub.s32 0, %v521
    %v523 = vrot.slane %v489, %v522
    %v524 = vlaneseq
    %v525 = vshrl.u32 %v524, 7
    %v526 = vsub.s32 1, %v525
    %v527 = vrot.slane %v489, %v526
    %v530 = vadd.f32 %v517, %v523
    %v531 = vadd.f32 %v518, %v527
    %v532 = vmax.f32 %v530, 0.0
    %v533 = vmax.f32 %v531, 0.0
    %v534 = vld [vmem:[#allocation8] sm:$0xff]
    %v535 = vld [vmem:[#allocation8 + $0x8] sm:$0xff]
    %v536 = vld [vmem:[#allocation8 + $0x10] sm:$0xff]
    %v537 = vld [vmem:[#allocation8 + $0x18] sm:$0xff]
    %v538 = vld [vmem:[#allocation8 + $0x20] sm:$0xff]
    %v539 = vld [vmem:[#allocation8 + $0x28] sm:$0xff]
    %v540 = vld [vmem:[#allocation8 + $0x30] sm:$0xff]
    %v541 = vld [vmem:[#allocation8 + $0x38] sm:$0xff]
    %v542 = vld [vmem:[#allocation8 + $0x40] sm:$0xff]
    %v543 = vld [vmem:[#allocation8 + $0x48] sm:$0xff]
    %v544 = vld [vmem:[#allocation8 + $0x50] sm:$0xff]
    %v545 = vld [vmem:[#allocation8 + $0x58] sm:$0xff]
    %v546 = vld [vmem:[#allocation8 + $0x60] sm:$0xff]
    %v547 = vld [vmem:[#allocation8 + $0x68] sm:$0xff]
    %v548 = vld [vmem:[#allocation8 + $0x70] sm:$0xff]
    %v549 = vld [vmem:[#allocation8 + $0x78] sm:$0xff]
    %v550 = vld [vmem:[#allocation8 + $0x80] sm:$0xff]
    %v551 = vld [vmem:[#allocation8 + $0x88] sm:$0xff]
    %v552 = vld [vmem:[#allocation8 + $0x90] sm:$0xff]
    %v553 = vld [vmem:[#allocation8 + $0x98] sm:$0xff]
    %v554 = vld [vmem:[#allocation8 + $0xa0] sm:$0xff]
    %v555 = vld [vmem:[#allocation8 + $0xa8] sm:$0xff]
    %v556 = vld [vmem:[#allocation8 + $0xb0] sm:$0xff]
    %v557 = vld [vmem:[#allocation8 + $0xb8] sm:$0xff]
    %v558 = vld [vmem:[#allocation8 + $0xc0] sm:$0xff]
    %v559 = vld [vmem:[#allocation8 + $0xc8] sm:$0xff]
    %v560 = vld [vmem:[#allocation8 + $0xd0] sm:$0xff]
    %v561 = vld [vmem:[#allocation8 + $0xd8] sm:$0xff]
    %v562 = vld [vmem:[#allocation8 + $0xe0] sm:$0xff]
    %v563 = vld [vmem:[#allocation8 + $0xe8] sm:$0xff]
    %v564 = vld [vmem:[#allocation8 + $0xf0] sm:$0xff]
    %v565 = vld [vmem:[#allocation8 + $0xf8] sm:$0xff]
    %v566 = vpack.c.bf16 %v532, %v532
    %v567 = vpack.c.bf16 %v533, %v533
    %v568 = vld [vmem:[%s10] sm:$0x3]
    %v570 = vlaneseq
    %v571 = vshrl.u32 %v570, 7
    %v572 = vsub.s32 0, %v571
    %v573 = vrot.slane %v568, %v572
    %v574 = vlaneseq
    %v575 = vshrl.u32 %v574, 7
    %v576 = vsub.s32 1, %v575
    %v577 = vrot.slane %v568, %v576
    %v612 = vunpack.c.l.b16 %v534
    %v613 = vunpack.c.h.b16 %v534
    %v614 = vunpack.c.l.b16 %v535
    %v615 = vunpack.c.h.b16 %v535
    %v616 = vunpack.c.l.b16 %v536
    %v617 = vunpack.c.h.b16 %v536
    %v618 = vunpack.c.l.b16 %v537
    %v619 = vunpack.c.h.b16 %v537
    %v620 = vunpack.c.l.b16 %v538
    %v621 = vunpack.c.h.b16 %v538
    %v622 = vunpack.c.l.b16 %v539
    %v623 = vunpack.c.h.b16 %v539
    %v624 = vunpack.c.l.b16 %v540
    %v625 = vunpack.c.h.b16 %v540
    %v626 = vunpack.c.l.b16 %v541
    %v627 = vunpack.c.h.b16 %v541
    %v628 = vunpack.c.l.b16 %v542
    %v629 = vunpack.c.h.b16 %v542
    %v630 = vunpack.c.l.b16 %v543
    %v631 = vunpack.c.h.b16 %v543
    %v632 = vunpack.c.l.b16 %v544
    %v633 = vunpack.c.h.b16 %v544
    %v634 = vunpack.c.l.b16 %v545
    %v635 = vunpack.c.h.b16 %v545
    %v636 = vunpack.c.l.b16 %v546
    %v637 = vunpack.c.h.b16 %v546
    %v638 = vunpack.c.l.b16 %v547
    %v639 = vunpack.c.h.b16 %v547
    %v640 = vunpack.c.l.b16 %v548
    %v641 = vunpack.c.h.b16 %v548
    %v642 = vunpack.c.l.b16 %v549
    %v643 = vunpack.c.h.b16 %v549
    %v644 = vunpack.c.l.b16 %v550
    %v645 = vunpack.c.h.b16 %v550
    %v646 = vunpack.c.l.b16 %v551
    %v647 = vunpack.c.h.b16 %v551
    %v648 = vunpack.c.l.b16 %v552
    %v649 = vunpack.c.h.b16 %v552
    %v650 = vunpack.c.l.b16 %v553
    %v651 = vunpack.c.h.b16 %v553
    %v652 = vunpack.c.l.b16 %v554
    %v653 = vunpack.c.h.b16 %v554
    %v654 = vunpack.c.l.b16 %v555
    %v655 = vunpack.c.h.b16 %v555
    %v656 = vunpack.c.l.b16 %v556
    %v657 = vunpack.c.h.b16 %v556
    %v658 = vunpack.c.l.b16 %v557
    %v659 = vunpack.c.h.b16 %v557
    %v660 = vunpack.c.l.b16 %v558
    %v661 = vunpack.c.h.b16 %v558
    %v662 = vunpack.c.l.b16 %v559
    %v663 = vunpack.c.h.b16 %v559
    %v664 = vunpack.c.l.b16 %v560
    %v665 = vunpack.c.h.b16 %v560
    %v666 = vunpack.c.l.b16 %v561
    %v667 = vunpack.c.h.b16 %v561
    %v668 = vunpack.c.l.b16 %v562
    %v669 = vunpack.c.h.b16 %v562
    %v670 = vunpack.c.l.b16 %v563
    %v671 = vunpack.c.h.b16 %v563
    %v672 = vunpack.c.l.b16 %v564
    %v673 = vunpack.c.h.b16 %v564
    %v674 = vunpack.c.l.b16 %v565
    %v675 = vunpack.c.h.b16 %v565
    %v676 = vpack.c.b16 %v614, %v612
    %v677 = vpack.c.b16 %v615, %v613
    %v678 = vpack.c.b16 %v618, %v616
    %v679 = vpack.c.b16 %v619, %v617
    %v680 = vpack.c.b16 %v622, %v620
    %v681 = vpack.c.b16 %v623, %v621
    %v682 = vpack.c.b16 %v626, %v624
    %v683 = vpack.c.b16 %v627, %v625
    %v684 = vpack.c.b16 %v630, %v628
    %v685 = vpack.c.b16 %v631, %v629
    %v686 = vpack.c.b16 %v634, %v632
    %v687 = vpack.c.b16 %v635, %v633
    %v688 = vpack.c.b16 %v638, %v636
    %v689 = vpack.c.b16 %v639, %v637
    %v690 = vpack.c.b16 %v642, %v640
    %v691 = vpack.c.b16 %v643, %v641
    %v692 = vpack.c.b16 %v646, %v644
    %v693 = vpack.c.b16 %v647, %v645
    %v694 = vpack.c.b16 %v650, %v648
    %v695 = vpack.c.b16 %v651, %v649
    %v696 = vpack.c.b16 %v654, %v652
    %v697 = vpack.c.b16 %v655, %v653
    %v698 = vpack.c.b16 %v658, %v656
    %v699 = vpack.c.b16 %v659, %v657
    %v700 = vpack.c.b16 %v662, %v660
    %v701 = vpack.c.b16 %v663, %v661
    %v702 = vpack.c.b16 %v666, %v664
    %v703 = vpack.c.b16 %v667, %v665
    %v704 = vpack.c.b16 %v670, %v668
    %v705 = vpack.c.b16 %v671, %v669
    %v706 = vpack.c.b16 %v674, %v672
    %v707 = vpack.c.b16 %v675, %v673
    %740 = vmatprep.subr.bf16.mxu0 %v677
    %741 = vmatpush1.bf16.msra.mxu0 %v676
    %742 = vmatprep.subr.bf16.mxu0 %v679
    %743 = vmatpush1.bf16.msra.mxu0 %v678
    %744 = vmatprep.subr.bf16.mxu0 %v681
    %745 = vmatpush1.bf16.msra.mxu0 %v680
    %746 = vmatprep.subr.bf16.mxu0 %v683
    %747 = vmatpush1.bf16.msra.mxu0 %v682
    %748 = vmatprep.subr.bf16.mxu0 %v685
    %749 = vmatpush1.bf16.msra.mxu0 %v684
    %750 = vmatprep.subr.bf16.mxu0 %v687
    %751 = vmatpush1.bf16.msra.mxu0 %v686
    %752 = vmatprep.subr.bf16.mxu0 %v689
    %753 = vmatpush1.bf16.msra.mxu0 %v688
    %754 = vmatprep.subr.bf16.mxu0 %v691
    %755 = vmatpush1.bf16.msra.mxu0 %v690
    %756 = vmatprep.subr.bf16.mxu0 %v693
    %757 = vmatpush1.bf16.msra.mxu0 %v692
    %758 = vmatprep.subr.bf16.mxu0 %v695
    %759 = vmatpush1.bf16.msra.mxu0 %v694
    %760 = vmatprep.subr.bf16.mxu0 %v697
    %761 = vmatpush1.bf16.msra.mxu0 %v696
    %762 = vmatprep.subr.bf16.mxu0 %v699
    %763 = vmatpush1.bf16.msra.mxu0 %v698
    %764 = vmatprep.subr.bf16.mxu0 %v701
    %765 = vmatpush1.bf16.msra.mxu0 %v700
    %766 = vmatprep.subr.bf16.mxu0 %v703
    %767 = vmatpush1.bf16.msra.mxu0 %v702
    %768 = vmatprep.subr.bf16.mxu0 %v705
    %769 = vmatpush1.bf16.msra.mxu0 %v704
    %770 = vmatprep.subr.bf16.mxu0 %v707
    %771 = vmatpush1.bf16.msra.mxu0 %v706
    %772 = vmatprep.mubr.bf16.mxu0 %v567
    %773 = vmatmul.mubr.bf16.gmra.mrb[0].mxu0 %v566
    %v774 = vpop.f32.mrb[0].mxu0
    %v775 = vadd.f32 %v573, %v774
    %v776 = vpop.f32.mrb[0].mxu0
    %v777 = vadd.f32 %v577, %v776
    %v778 = vpop.f32.mrb[0].mxu0
    %v779 = vpop.f32.mrb[0].mxu0
    %780 = vdwg.mxu0
    %v781 = vld [vmem:[%s11] sm:$0x1]
    %v782 = vld [vmem:[%s12] sm:$0x1]
    %783 = vadd.xlane.f32.xlu0 %v775
    %v784 = vpop.xlane.xlu0 %783
    %v785 = vrcp.pop 128.0
    %v786 = vmul.f32 %v784, %v785
    %v787 = vsub.f32 %v775, %v786
    %v788 = vmul.f32 %v787, %v787
    %789 = vadd.xlane.f32.xlu0 %v788
    %v790 = vpop.xlane.xlu0 %789
    %v791 = vmul.f32 %v790, %v785
    %v792 = vadd.f32 %v791, 1e-05
    %v793 = vrsqrt.pop %v792
    %v794 = vmul.f32 %v787, %v793
    %v796 = vlaneseq
    %v797 = vshrl.u32 %v796, 7
    %v798 = vsub.s32 0, %v797
    %v799 = vrot.slane %v781, %v798
    %v801 = vmul.f32 %v794, %v799
    %v803 = vlaneseq
    %v804 = vshrl.u32 %v803, 7
    %v805 = vsub.s32 0, %v804
    %v806 = vrot.slane %v782, %v805
    %v808 = vadd.f32 %v801, %v806
    %v809 = vmax.f32 %v808, 0.0
    %v810 = vld [vmem:[%s13] sm:$0x1]
    %v811 = vld [vmem:[%s14] sm:$0x1]
    %812 = vadd.xlane.f32.xlu0 %v777
    %v813 = vpop.xlane.xlu0 %812
    %v814 = vmul.f32 %v813, %v785
    %v815 = vsub.f32 %v777, %v814
    %v816 = vmul.f32 %v815, %v815
    %817 = vadd.xlane.f32.xlu0 %v816
    %v818 = vpop.xlane.xlu0 %817
    %v819 = vmul.f32 %v818, %v785
    %v820 = vadd.f32 %v819, 1e-05
    %v821 = vrsqrt.pop %v820
    %v822 = vmul.f32 %v815, %v821
    %v824 = vlaneseq
    %v825 = vshrl.u32 %v824, 7
    %v826 = vsub.s32 0, %v825
    %v827 = vrot.slane %v810, %v826
    %v829 = vmul.f32 %v822, %v827
    %v831 = vlaneseq
    %v832 = vshrl.u32 %v831, 7
    %v833 = vsub.s32 0, %v832
    %v834 = vrot.slane %v811, %v833
    %v836 = vadd.f32 %v829, %v834
    %v837 = vmax.f32 %v836, 0.0
    %v838 = vld [vmem:[#allocation10] sm:$0xf]
    %v839 = vld [vmem:[#allocation10 + $0x4] sm:$0xf]
    %v840 = vld [vmem:[#allocation10 + $0x8] sm:$0xf]
    %v841 = vld [vmem:[#allocation10 + $0xc] sm:$0xf]
    %v842 = vld [vmem:[#allocation10 + $0x10] sm:$0xf]
    %v843 = vld [vmem:[#allocation10 + $0x14] sm:$0xf]
    %v844 = vld [vmem:[#allocation10 + $0x18] sm:$0xf]
    %v845 = vld [vmem:[#allocation10 + $0x1c] sm:$0xf]
    %v846 = vld [vmem:[#allocation10 + $0x20] sm:$0xf]
    %v847 = vld [vmem:[#allocation10 + $0x24] sm:$0xf]
    %v848 = vld [vmem:[#allocation10 + $0x28] sm:$0xf]
    %v849 = vld [vmem:[#allocation10 + $0x2c] sm:$0xf]
    %v850 = vld [vmem:[#allocation10 + $0x30] sm:$0xf]
    %v851 = vld [vmem:[#allocation10 + $0x34] sm:$0xf]
    %v852 = vld [vmem:[#allocation10 + $0x38] sm:$0xf]
    %v853 = vld [vmem:[#allocation10 + $0x3c] sm:$0xf]
    %v854 = vld [vmem:[#allocation10 + $0x40] sm:$0xf]
    %v855 = vld [vmem:[#allocation10 + $0x44] sm:$0xf]
    %v856 = vld [vmem:[#allocation10 + $0x48] sm:$0xf]
    %v857 = vld [vmem:[#allocation10 + $0x4c] sm:$0xf]
    %v858 = vld [vmem:[#allocation10 + $0x50] sm:$0xf]
    %v859 = vld [vmem:[#allocation10 + $0x54] sm:$0xf]
    %v860 = vld [vmem:[#allocation10 + $0x58] sm:$0xf]
    %v861 = vld [vmem:[#allocation10 + $0x5c] sm:$0xf]
    %v862 = vld [vmem:[#allocation10 + $0x60] sm:$0xf]
    %v863 = vld [vmem:[#allocation10 + $0x64] sm:$0xf]
    %v864 = vld [vmem:[#allocation10 + $0x68] sm:$0xf]
    %v865 = vld [vmem:[#allocation10 + $0x6c] sm:$0xf]
    %v866 = vld [vmem:[#allocation10 + $0x70] sm:$0xf]
    %v867 = vld [vmem:[#allocation10 + $0x74] sm:$0xf]
    %v868 = vld [vmem:[#allocation10 + $0x78] sm:$0xf]
    %v869 = vld [vmem:[#allocation10 + $0x7c] sm:$0xf]
    %v870 = vpack.c.bf16 %v809, %v809
    %v871 = vpack.c.bf16 %v837, %v837
    %v872 = vld [vmem:[%s16] sm:$0x1]
    %v874 = vlaneseq
    %v875 = vshrl.u32 %v874, 7
    %v876 = vsub.s32 0, %v875
    %v877 = vrot.slane %v872, %v876
    %v911 = vunpack.c.l.b16 %v838
    %v912 = vunpack.c.l.b16 %v839
    %v913 = vunpack.c.l.b16 %v840
    %v914 = vunpack.c.l.b16 %v841
    %v915 = vunpack.c.l.b16 %v842
    %v916 = vunpack.c.l.b16 %v843
    %v917 = vunpack.c.l.b16 %v844
    %v918 = vunpack.c.l.b16 %v845
    %v919 = vunpack.c.l.b16 %v846
    %v920 = vunpack.c.l.b16 %v847
    %v921 = vunpack.c.l.b16 %v848
    %v922 = vunpack.c.l.b16 %v849
    %v923 = vunpack.c.l.b16 %v850
    %v924 = vunpack.c.l.b16 %v851
    %v925 = vunpack.c.l.b16 %v852
    %v926 = vunpack.c.l.b16 %v853
    %v927 = vunpack.c.l.b16 %v854
    %v928 = vunpack.c.l.b16 %v855
    %v929 = vunpack.c.l.b16 %v856
    %v930 = vunpack.c.l.b16 %v857
    %v931 = vunpack.c.l.b16 %v858
    %v932 = vunpack.c.l.b16 %v859
    %v933 = vunpack.c.l.b16 %v860
    %v934 = vunpack.c.l.b16 %v861
    %v935 = vunpack.c.l.b16 %v862
    %v936 = vunpack.c.l.b16 %v863
    %v937 = vunpack.c.l.b16 %v864
    %v938 = vunpack.c.l.b16 %v865
    %v939 = vunpack.c.l.b16 %v866
    %v940 = vunpack.c.l.b16 %v867
    %v941 = vunpack.c.l.b16 %v868
    %v942 = vunpack.c.l.b16 %v869
    %v943 = vpack.c.b16 %v912, %v911
    %v944 = vpack.c.b16 %v914, %v913
    %v945 = vpack.c.b16 %v916, %v915
    %v946 = vpack.c.b16 %v918, %v917
    %v947 = vpack.c.b16 %v920, %v919
    %v948 = vpack.c.b16 %v922, %v921
    %v949 = vpack.c.b16 %v924, %v923
    %v950 = vpack.c.b16 %v926, %v925
    %v951 = vpack.c.b16 %v928, %v927
    %v952 = vpack.c.b16 %v930, %v929
    %v953 = vpack.c.b16 %v932, %v931
    %v954 = vpack.c.b16 %v934, %v933
    %v955 = vpack.c.b16 %v936, %v935
    %v956 = vpack.c.b16 %v938, %v937
    %v957 = vpack.c.b16 %v940, %v939
    %v958 = vpack.c.b16 %v942, %v941
    %975 = vmatprep.subr.bf16.mxu0 0
    %976 = vmatpush1.bf16.msra.mxu0 %v943
    %977 = vmatprep.subr.bf16.mxu0 0
    %978 = vmatpush1.bf16.msra.mxu0 %v944
    %979 = vmatprep.subr.bf16.mxu0 0
    %980 = vmatpush1.bf16.msra.mxu0 %v945
    %981 = vmatprep.subr.bf16.mxu0 0
    %982 = vmatpush1.bf16.msra.mxu0 %v946
    %983 = vmatprep.subr.bf16.mxu0 0
    %984 = vmatpush1.bf16.msra.mxu0 %v947
    %985 = vmatprep.subr.bf16.mxu0 0
    %986 = vmatpush1.bf16.msra.mxu0 %v948
    %987 = vmatprep.subr.bf16.mxu0 0
    %988 = vmatpush1.bf16.msra.mxu0 %v949
    %989 = vmatprep.subr.bf16.mxu0 0
    %990 = vmatpush1.bf16.msra.mxu0 %v950
    %991 = vmatprep.subr.bf16.mxu0 0
    %992 = vmatpush1.bf16.msra.mxu0 %v951
    %993 = vmatprep.subr.bf16.mxu0 0
    %994 = vmatpush1.bf16.msra.mxu0 %v952
    %995 = vmatprep.subr.bf16.mxu0 0
    %996 = vmatpush1.bf16.msra.mxu0 %v953
    %997 = vmatprep.subr.bf16.mxu0 0
    %998 = vmatpush1.bf16.msra.mxu0 %v954
    %999 = vmatprep.subr.bf16.mxu0 0
    %1000 = vmatpush1.bf16.msra.mxu0 %v955
    %1001 = vmatprep.subr.bf16.mxu0 0
    %1002 = vmatpush1.bf16.msra.mxu0 %v956
    %1003 = vmatprep.subr.bf16.mxu0 0
    %1004 = vmatpush1.bf16.msra.mxu0 %v957
    %1005 = vmatprep.subr.bf16.mxu0 0
    %1006 = vmatpush1.bf16.msra.mxu0 %v958
    %1007 = vmatprep.mubr.bf16.mxu0 %v871
    %1008 = vmatmul.mubr.bf16.gmra.mrb[0].mxu0 %v870
    %v1009 = vpop.f32.mrb[0].mxu0
    %v1010 = vadd.f32 %v877, %v1009
    %v1011 = vpop.f32.mrb[0].mxu0
    %v1012 = vpop.f32.mrb[0].mxu0
    %v1013 = vpop.f32.mrb[0].mxu0
    %1014 = vdwg.mxu0
    %v1015 = vlaneseq
    %v1016 = vand.u32 %v1015, 127
    %vm1017 = vcmp.lt.s32.totalorder %v1016, 4
    %vm1018 = vcmp.ge.s32.totalorder %v1016, 4
    %vm1019 = vcmp.lt.s32.totalorder %v1016, 8
    %vm1020 = vmand %vm1018, %vm1019
    %vm1021 = vcmp.eq.s32.totalorder %v1016, 8
    %v1022 = vmul.f32 %v1010, 2.0
    %v1023 = vmax.f32 %v1022, -60.0
    %v1024 = vmin.f32 %v1023, 60.0
    %v1025 = vmax.f32 %v1010, -20.0
    %v1026 = vmin.f32 %v1025, 2.0
    %v1027 = vsel %vm1017, %v1024, %v1026
    %v1028 = vmul.f32 %v1027, 1.442695
    %v1029 = vpow.pop %v1028
    %v1030 = vsub.f32 %v1029, 1.0
    %v1031 = vadd.f32 %v1029, 1.0
    %v1032 = vrcp.pop %v1031
    %v1033 = vmul.f32 %v1030, %v1032
    %v1034 = vsel %vm1021, %v1010, 0.0
    %v1035 = vsel %vm1020, %v1029, %v1034
    %v1036 = vsel %vm1017, %v1033, %v1035
    %1037 = vst [vmem:[#allocation11] sm:$0xff] %v1036
    // Predicated region
    $region90: #{tpu_custom_call.1} parent=1 // pred_check
      _
    $region91: #{tpu_custom_call.1} parent=1 // pred_check_branch
      %1039 = sbr.rel (0) target = $region93
    $region92: #{tpu_custom_call.1} parent=1 // pred_region
      %s1041 = ssub.s32 128, 128
      %1042 = vsyncadd [#allocation4], %s1041
      %s1044 = sshll.u32 [#allocation11], 4
      %s1045 = int_to_ptr.vmem [resolvable:$true] %s1044
      %1047 = dma.vmem_to_hbm [thread:$0]  %s1045, 128, %s17, [#allocation4]
    $region93: #{tpu_custom_call.1} parent=1 // pred_fallthru
      _
    // Predicated region
    $region94: #{tpu_custom_call.1} parent=1 // pred_check
      _
    $region95: #{tpu_custom_call.1} parent=1 // pred_check_branch
      %1049 = sbr.rel (0) target = $region97
    $region96: #{tpu_custom_call.1} parent=1 // pred_region
      %1050 = dma.done [#allocation4], 128
    $region97: #{tpu_custom_call.1} parent=1 // pred_fallthru
      _
    %1051 = vsyncpa [#allocation3], 1
    %1052 = vsyncpa [#allocation6], 1
    %1053 = vsyncpa [#allocation9], 1
    %1054 = vsyncpa [#allocation4], 1

</llo_original>
